<compile_context>
chip_gen: v7x
topology: tpu7x:2x2x1
jax: 0.10.0
libtpu: 0.0.40
codegen_flags: <defaults>
</compile_context>

<pallas_src>
import functools

import jax
import jax.numpy as jnp
from jax import lax
from jax.experimental import pallas as pl
from jax.experimental.pallas import tpu as pltpu

_LANE = 128      # VMEM minor-dim tiling
_SUBLANE = 8     # f32 sublane packing


def _round_up(x, m):
    return ((x + m - 1) // m) * m


def _vmem_plan():
    """Returns (budget_bytes for Pallas buffers, vmem_limit_bytes to request).

    Generation-aware via get_tpu_info, but the requested scoped limit is capped at
    56 MiB so it is always below the smallest physical VMEM (v7x: 64 MiB/TC)."""
    try:
        info = pltpu.get_tpu_info()
        cap = int(getattr(info, "vmem_capacity_bytes", 0)) or (64 << 20)
    except Exception:  # e.g. interpret mode / no TPU info available
        cap = 64 << 20
    vmem_limit = max(24 << 20, min((cap * 3) // 4, 56 << 20))
    budget = vmem_limit - (8 << 20)     # headroom for compiler-internal scratch
    return budget, vmem_limit


def _row_bytes(d):
    # One f32 row of z (lane-padded) + one lane-padded row of the (tm, 1) energy tile.
    return 4 * _round_up(d, _LANE) + 4 * _LANE


def _fits_resident(n, d, budget):
    # Factor 3 (not 2) on the per-row bytes: double-buffered block + slack for an
    # in-kernel f32 temporary of the converted z value.
    w_bytes = 2 * 4 * _round_up(d, _SUBLANE) * _round_up(d, _LANE)
    misc = 1 << 20
    return 3 * _round_up(n, _SUBLANE) * _row_bytes(d) + w_bytes + misc <= budget


def _pick_tm(n, d, budget):
    """Row-tile for the streaming path: as big as the VMEM budget allows (double
    buffered), but keep >= 4 grid steps so pipelining / megacore still work."""
    misc = 1 << 20
    tm = (budget - misc) // (2 * _row_bytes(d))
    tm = min(tm, _round_up(-(-n // 4), _SUBLANE))
    tm = max(_SUBLANE, (tm // _SUBLANE) * _SUBLANE)
    return int(tm)


# ---------------------------------------------------------------------------
# Fast path: whole z resident in VMEM — one pallas_call, one HBM read of z.
#   c = mean(z);  v = c @ W (MXU);  s = b . c;  energy = -(z . v + s)
# ---------------------------------------------------------------------------
def _degem_fused_kernel(z_ref, w_ref, b_ref, e_ref, c_ref, *, n_rows):
    z = z_ref[...].astype(jnp.float32)                               # (N, D)
    c = jnp.sum(z, axis=0, keepdims=True) * jnp.float32(1.0 / n_rows)
    c_ref[...] = c
    # Broadcast c to 8 sublanes so the MXU matmul has a full (8, D) lhs tile.
    c8 = jnp.broadcast_to(c, (8, c.shape[1]))
    v = jnp.dot(c8, w_ref[...], preferred_element_type=jnp.float32)[0:1, :]
    s = jnp.sum(b_ref[...] * c, axis=-1, keepdims=True)              # (1, 1)
    e_ref[...] = -(jnp.sum(z * v, axis=-1, keepdims=True) + s)


def _degem_fused(z, w32, b2, *, vmem_limit):
    n, d = z.shape
    energy2d, c = pl.pallas_call(
        functools.partial(_degem_fused_kernel, n_rows=n),
        out_shape=(jax.ShapeDtypeStruct((n, 1), jnp.float32),
                   jax.ShapeDtypeStruct((1, d), jnp.float32)),
        grid_spec=pltpu.PrefetchScalarGridSpec(
            num_scalar_prefetch=0,
            grid=(1,),
            in_specs=[pl.BlockSpec((n, d), lambda i: (0, 0)),
                      pl.BlockSpec((d, d), lambda i: (0, 0)),
                      pl.BlockSpec((1, d), lambda i: (0, 0))],
            out_specs=[pl.BlockSpec((n, 1), lambda i: (0, 0)),
                       pl.BlockSpec((1, d), lambda i: (0, 0))],
        ),
        compiler_params=pltpu.CompilerParams(
            dimension_semantics=("arbitrary",),
            vmem_limit_bytes=vmem_limit),
    )(z, w32, b2)
    return energy2d, c


# ---------------------------------------------------------------------------
# Streaming path, pass 1: column mean (masked ragged tail, no padded HBM copy).
# The (1, D) output block has a constant index_map -> resident accumulator.
# ---------------------------------------------------------------------------
def _readout_mean_kernel(z_ref, c_ref, *, n_rows, tm):
    i = pl.program_id(0)

    @pl.when(i == 0)
    def _():
        c_ref[...] = jnp.zeros_like(c_ref)

    z = z_ref[...].astype(jnp.float32)
    # Rows past the true N in the last (partial) tile are undefined -> mask them.
    row = i * tm + lax.broadcasted_iota(jnp.int32, z.shape, 0)
    z = jnp.where(row < n_rows, z, 0.0)
    c_ref[...] += jnp.sum(z, axis=0, keepdims=True)

    @pl.when(i == pl.num_programs(0) - 1)
    def _():
        c_ref[...] = c_ref[...] * jnp.float32(1.0 / n_rows)


def _readout_mean(z, *, tm, vmem_limit):
    n, d = z.shape
    return pl.pallas_call(
        functools.partial(_readout_mean_kernel, n_rows=n, tm=tm),
        out_shape=jax.ShapeDtypeStruct((1, d), jnp.float32),
        grid_spec=pltpu.PrefetchScalarGridSpec(
            num_scalar_prefetch=0,
            grid=(pl.cdiv(n, tm),),
            in_specs=[pl.BlockSpec((tm, d), lambda i: (i, 0))],
            out_specs=pl.BlockSpec((1, d), lambda i: (0, 0)),
        ),
        compiler_params=pltpu.CompilerParams(
            dimension_semantics=("arbitrary",),
            vmem_limit_bytes=vmem_limit),
    )(z)


# ---------------------------------------------------------------------------
# Streaming path, pass 2: folded energy  energy_i = -(z_i . v + s)
#   v = c @ W, s = b . c  (fold done once in XLA between the two calls).
# Tail-tile rows >= N produce garbage that Pallas' partial-block store drops.
# ---------------------------------------------------------------------------
def _energy_kernel(z_ref, v_ref, s_ref, e_ref):
    z = z_ref[...].astype(jnp.float32)
    e_ref[...] = -(jnp.sum(z * v_ref[...], axis=-1, keepdims=True) + s_ref[...])


def _energy(z, v, s, *, tm, vmem_limit):
    n, d = z.shape
    return pl.pallas_call(
        _energy_kernel,
        out_shape=jax.ShapeDtypeStruct((n, 1), jnp.float32),
        grid_spec=pltpu.PrefetchScalarGridSpec(
            num_scalar_prefetch=0,
            grid=(pl.cdiv(n, tm),),
            in_specs=[pl.BlockSpec((tm, d), lambda i: (i, 0)),   # z tile (streamed)
                      pl.BlockSpec((1, d), lambda i: (0, 0)),    # v = c @ W (resident)
                      pl.BlockSpec((1, 1), lambda i: (0, 0))],   # s = b . c (resident)
            out_specs=pl.BlockSpec((tm, 1), lambda i: (i, 0)),
        ),
        compiler_params=pltpu.CompilerParams(
            dimension_semantics=("parallel",),
            vmem_limit_bytes=vmem_limit),
    )(z, v, s)


# ---------------------------------------------------------------------------
# DeGEM.forward (backbone='bilinear', fresh module so self.p is None).
# ---------------------------------------------------------------------------
def degem_forward(z_pos, z_neg, W, b, *, force_streaming=False):
    n, d = z_pos.shape
    budget, vmem_limit = _vmem_plan()

    W32 = W.astype(jnp.float32)
    b2 = b.reshape(1, d).astype(jnp.float32)

    if (not force_streaming) and _fits_resident(n, d, budget):
        # One launch, one HBM read of z (z, W, b all resident in VMEM).
        # TODO(synk): for very large cl_hdim (D*D*4 beyond the VMEM budget) this
        # path is disabled by _fits_resident and the streaming path is used.
        energy2d, _c = _degem_fused(z_pos, W32, b2, vmem_limit=vmem_limit)
    else:
        tm = _pick_tm(n, d, budget)
        c = _readout_mean(z_pos, tm=tm, vmem_limit=vmem_limit)           # (1, d)
        # Algebraic fold (exact):  -(x @ W.T + b) . c == -(x . (c @ W) + b . c)
        v = c @ W32                                                      # (1, d)
        s = jnp.sum(b2 * c, axis=-1, keepdims=True)                      # (1, 1)
        energy2d = _energy(z_pos, v, s, tm=tm, vmem_limit=vmem_limit)    # (n, 1)

    energy = energy2d[:, 0]
    return z_pos, z_neg, energy


if __name__ == "__main__":
    # N nodes, cl_hdim D. Synthetic "encoder" outputs (DGI not provided).
    N, D = 1000, 128
    key = jax.random.PRNGKey(0)
    k1, k2, k3, k4 = jax.random.split(key, 4)

    z_pos = jax.random.normal(k1, (N, D), dtype=jnp.float32)
    z_neg = jax.random.normal(k2, (N, D), dtype=jnp.float32)

    # Deterministic DiscEnergyNet.proj parameters (torch Linear-style uniform init).
    bound = 1.0 / jnp.sqrt(jnp.float32(D))
    W = jax.random.uniform(k3, (D, D), jnp.float32, -bound, bound)
    b = jax.random.uniform(k4, (D,), jnp.float32, -bound, bound)

    # Pure-JAX reference of the same forward semantics.
    c_ref = jnp.mean(z_pos, axis=0, keepdims=True)
    energy_ref = -jnp.sum((z_pos @ W.T + b[None, :]) * c_ref, axis=-1)

    # Path 1: fused z-resident kernel (whole z fits VMEM at this size).
    zp, zn, energy = degem_forward(z_pos, z_neg, W, b)
    jax.block_until_ready((zp, zn, energy))
    assert energy.shape == (N,)
    assert jnp.allclose(energy, energy_ref, atol=1e-3, rtol=1e-3), \
        float(jnp.max(jnp.abs(energy - energy_ref)))

    # Path 2: streaming two-pass kernels (exercises the masked ragged tail:
    # tm=256 -> grid of 4 tiles, last tile partially out of bounds).
    _, _, energy_s = degem_forward(z_pos, z_neg, W, b, force_streaming=True)
    jax.block_until_ready(energy_s)
    assert energy_s.shape == (N,)
    assert jnp.allclose(energy_s, energy_ref, atol=1e-3, rtol=1e-3), \
        float(jnp.max(jnp.abs(energy_s - energy_ref)))

    print("KERNEL_OK")
</pallas_src>

<mosaic_0001>
module attributes {stable_mosaic.version = 11 : i64} {
  func.func @_degem_fused_kernel(%arg0: i32, %arg1: memref<1000x128xf32, #tpu.memory_space<vmem>>, %arg2: memref<128x128xf32, #tpu.memory_space<vmem>>, %arg3: memref<1x128xf32, #tpu.memory_space<vmem>>, %arg4: memref<1000x1xf32, #tpu.memory_space<vmem>>, %arg5: memref<1x128xf32, #tpu.memory_space<vmem>>) attributes {dimension_semantics = [#tpu.dimension_semantics<arbitrary>], iteration_bounds = array<i64: 1>, scalar_prefetch = 0 : i64, scratch_operands = 0 : i64, tpu.core_type = #tpu.core_type<tc>, window_params = [{pipeline_mode = #tpu.pipeline_mode<synchronous>, transform_indices = @transform_0, window_bounds = array<i64: 1000, 128>}, {pipeline_mode = #tpu.pipeline_mode<synchronous>, transform_indices = @transform_1, window_bounds = array<i64: 128, 128>}, {pipeline_mode = #tpu.pipeline_mode<synchronous>, transform_indices = @transform_2, window_bounds = array<i64: 1, 128>}, {pipeline_mode = #tpu.pipeline_mode<synchronous>, transform_indices = @transform_3, window_bounds = array<i64: 1000, 1>}, {pipeline_mode = #tpu.pipeline_mode<synchronous>, transform_indices = @transform_4, window_bounds = array<i64: 1, 128>}]} {
    %c0 = arith.constant 0 : index
    %c0_0 = arith.constant 0 : index
    %0 = vector.load %arg1[%c0, %c0_0] : memref<1000x128xf32, #tpu.memory_space<vmem>>, vector<1000x128xf32>
    %cst = arith.constant dense<0.000000e+00> : vector<128xf32>
    %1 = vector.multi_reduction <add>, %0, %cst [0] : vector<1000x128xf32> to vector<128xf32>
    %2 = vector.shape_cast %1 : vector<128xf32> to vector<1x128xf32>
    %cst_1 = arith.constant 1.000000e-03 : f32
    %3 = vector.broadcast %cst_1 : f32 to vector<1x128xf32>
    %4 = arith.mulf %2, %3 : vector<1x128xf32>
    %c0_2 = arith.constant 0 : index
    %c0_3 = arith.constant 0 : index
    %5 = vector.load %arg5[%c0_2, %c0_3] : memref<1x128xf32, #tpu.memory_space<vmem>>, vector<1x128xf32>
    tpu.vector_store %arg5[%c0_2, %c0_3], %4 {strides = array<i32>} : memref<1x128xf32, #tpu.memory_space<vmem>>, vector<1x128xf32>,
    %6 = vector.shape_cast %4 : vector<1x128xf32> to vector<1x128xf32>
    %7 = vector.broadcast %6 : vector<1x128xf32> to vector<8x128xf32>
    %c0_4 = arith.constant 0 : index
    %c0_5 = arith.constant 0 : index
    %8 = vector.load %arg2[%c0_4, %c0_5] : memref<128x128xf32, #tpu.memory_space<vmem>>, vector<128x128xf32>
    %cst_6 = arith.constant dense<0.000000e+00> : vector<8x128xf32>
    %9 = tpu.matmul %7, %8, %cst_6 {dimension_numbers = #tpu.dot_dimension_numbers<[1], [0], [0], [1], [0, 0, 1, 1], [], []>} : vector<8x128xf32>, vector<128x128xf32>, vector<8x128xf32> -> vector<8x128xf32>
    %10 = vector.extract_strided_slice %9 {offsets = [0, 0], sizes = [1, 128], strides = [1, 1]} : vector<8x128xf32> to vector<1x128xf32>
    %c0_7 = arith.constant 0 : index
    %c0_8 = arith.constant 0 : index
    %11 = vector.load %arg3[%c0_7, %c0_8] : memref<1x128xf32, #tpu.memory_space<vmem>>, vector<1x128xf32>
    %12 = arith.mulf %11, %4 : vector<1x128xf32>
    %cst_9 = arith.constant dense<0.000000e+00> : vector<1xf32>
    %13 = vector.multi_reduction <add>, %12, %cst_9 [1] : vector<1x128xf32> to vector<1xf32>
    %14 = vector.shape_cast %13 : vector<1xf32> to vector<1x1xf32>
    %15 = vector.broadcast %10 : vector<1x128xf32> to vector<1000x128xf32>
    %16 = arith.mulf %0, %15 : vector<1000x128xf32>
    %cst_10 = arith.constant dense<0.000000e+00> : vector<1000xf32>
    %17 = vector.multi_reduction <add>, %16, %cst_10 [1] : vector<1000x128xf32> to vector<1000xf32>
    %18 = vector.shape_cast %17 : vector<1000xf32> to vector<1000x1xf32>
    %19 = vector.broadcast %14 : vector<1x1xf32> to vector<1000x1xf32>
    %20 = arith.addf %18, %19 : vector<1000x1xf32>
    %cst_11 = arith.constant 0.000000e+00 : f32
    %21 = vector.broadcast %cst_11 : f32 to vector<1000x1xf32>
    %22 = arith.subf %21, %20 : vector<1000x1xf32>
    %c0_12 = arith.constant 0 : index
    %c0_13 = arith.constant 0 : index
    %23 = vector.load %arg4[%c0_12, %c0_13] : memref<1000x1xf32, #tpu.memory_space<vmem>>, vector<1000x1xf32>
    tpu.vector_store %arg4[%c0_12, %c0_13], %22 {strides = array<i32>} : memref<1000x1xf32, #tpu.memory_space<vmem>>, vector<1000x1xf32>,
    return
  }
  func.func @transform_0(%arg0: i32) -> (i32, i32) {
    %c0_i32 = arith.constant 0 : i32
    %c0_i32_0 = arith.constant 0 : i32
    %c0_i32_1 = arith.constant 0 : i32
    return %c0_i32, %c0_i32_0 : i32, i32
  }
  func.func @transform_1(%arg0: i32) -> (i32, i32) {
    %c0_i32 = arith.constant 0 : i32
    %c0_i32_0 = arith.constant 0 : i32
    %c0_i32_1 = arith.constant 0 : i32
    return %c0_i32, %c0_i32_0 : i32, i32
  }
  func.func @transform_2(%arg0: i32) -> (i32, i32) {
    %c0_i32 = arith.constant 0 : i32
    %c0_i32_0 = arith.constant 0 : i32
    %c0_i32_1 = arith.constant 0 : i32
    return %c0_i32, %c0_i32_0 : i32, i32
  }
  func.func @transform_3(%arg0: i32) -> (i32, i32) {
    %c0_i32 = arith.constant 0 : i32
    %c0_i32_0 = arith.constant 0 : i32
    %c0_i32_1 = arith.constant 0 : i32
    return %c0_i32, %c0_i32_0 : i32, i32
  }
  func.func @transform_4(%arg0: i32) -> (i32, i32) {
    %c0_i32 = arith.constant 0 : i32
    %c0_i32_0 = arith.constant 0 : i32
    %c0_i32_1 = arith.constant 0 : i32
    return %c0_i32, %c0_i32_0 : i32, i32
  }
}

</mosaic_0001>

<llo_original>
// kernel: tpu_custom_call.1
$region0: #{tpu_custom_call.1}
  #allocation0 [shape = 'u32[]', space=smem, size = 0x4, offset = 0x4, fixed_abs, tag = 'smem constant byte address 0x4 - core index']
  #allocation1 [shape = 'u32[144,128]{1,0:T(1,128)}', space=vmem, size = 0x12000, scoped, tag = 'internal scratch']
  %s0 = inlined_call_operand.hbm [shape: f32[1000,128], index: 0, kind: input, shape index: {}]
  %s1 = inlined_call_operand.hbm [shape: f32[128,128], index: 1, kind: input, shape index: {}]
  %s2 = inlined_call_operand.vmem [shape: f32[1,128], index: 2, kind: input, shape index: {}]
  %s3 = inlined_call_operand.vmem [shape: f32[1000,1], index: 3, kind: output, shape index: {0}]
  %s4 = inlined_call_operand.hbm [shape: f32[1,128], index: 4, kind: output, shape index: {1}]
  %5 = xla_tuple %s3, %s4
  %s6 = sld [smem:[#allocation0]]
  $region38: #{tpu_custom_call.1} parent=0
    _
  %s8 = ssub.s32 1, %s6
  %s9 = scalar_select 0, %s8, %s6
  $region1: #{tpu_custom_call.1} parent=0
    #allocation2 [shape = 'u8[512000]{0}', space=vmem, size = 0x7d000, scoped, tag = 'input window, operand 0, single buffered']
    #allocation3 [shape = 's32[1]{0}', space=sflag, size = 0x4, scoped, tag = 'scoped memory for tpu_custom_call.1']
    #allocation4 [shape = 's32[1]{0}', space=sflag, size = 0x4, scoped, tag = 'scoped memory for tpu_custom_call.1']
    #allocation5 [shape = 'u8[65536]{0}', space=vmem, size = 0x10000, scoped, tag = 'input window, operand 1, single buffered']
    #allocation6 [shape = 's32[1]{0}', space=sflag, size = 0x4, scoped, tag = 'scoped memory for tpu_custom_call.1']
    #allocation7 [shape = 'u8[512]{0}', space=vmem, size = 0x400, scoped, tag = 'output window, operand 1, single buffered']
    %10 = vsyncpa [#allocation3], 0
    %11 = vsyncpa [#allocation6], 0
    %12 = vsyncpa [#allocation4], 0
    // Predicated region
    $region2: #{tpu_custom_call.1} parent=1 // pred_check
      _
    $region3: #{tpu_custom_call.1} parent=1 // pred_check_branch
      %14 = sbr.rel (0) target = $region5
    $region4: #{tpu_custom_call.1} parent=1 // pred_region
      %s16 = ssub.s32 16000, 16000
      %17 = vsyncadd [#allocation3], %s16
      %s18 = sshll.u32 [#allocation2], 4
      %s19 = int_to_ptr.vmem [resolvable:$true] %s18
      %24 = dma.hbm_to_vmem [thread:$0]  %s0, 16000, %s19, [#allocation3], 128, 128, 8
    $region5: #{tpu_custom_call.1} parent=1 // pred_fallthru
      _
    // Predicated region
    $region6: #{tpu_custom_call.1} parent=1 // pred_check
      _
    $region7: #{tpu_custom_call.1} parent=1 // pred_check_branch
      %26 = sbr.rel (0) target = $region9
    $region8: #{tpu_custom_call.1} parent=1 // pred_region
      %s28 = ssub.s32 2048, 2048
      %29 = vsyncadd [#allocation6], %s28
      %s30 = sshll.u32 [#allocation5], 4
      %s31 = int_to_ptr.vmem [resolvable:$true] %s30
      %36 = dma.hbm_to_vmem [thread:$0]  %s1, 2048, %s31, [#allocation6], 128, 128, 8
    $region9: #{tpu_custom_call.1} parent=1 // pred_fallthru
      _
    // Predicated region
    $region10: #{tpu_custom_call.1} parent=1 // pred_check
      _
    $region11: #{tpu_custom_call.1} parent=1 // pred_check_branch
      %38 = sbr.rel (0) target = $region13
    $region12: #{tpu_custom_call.1} parent=1 // pred_region
      _
    $region13: #{tpu_custom_call.1} parent=1 // pred_fallthru
      _
    // Predicated region
    $region14: #{tpu_custom_call.1} parent=1 // pred_check
      _
    $region15: #{tpu_custom_call.1} parent=1 // pred_check_branch
      %40 = sbr.rel (0) target = $region17
    $region16: #{tpu_custom_call.1} parent=1 // pred_region
      %41 = dma.done [#allocation3], 16000
    $region17: #{tpu_custom_call.1} parent=1 // pred_fallthru
      _
    // Predicated region
    $region18: #{tpu_custom_call.1} parent=1 // pred_check
      _
    $region19: #{tpu_custom_call.1} parent=1 // pred_check_branch
      %43 = sbr.rel (0) target = $region21
    $region20: #{tpu_custom_call.1} parent=1 // pred_region
      %44 = dma.done [#allocation6], 2048
    $region21: #{tpu_custom_call.1} parent=1 // pred_fallthru
      _
    %v45 = vld [vmem:[#allocation2] sm:$0xff]
    %v46 = vld [vmem:[#allocation2 + $0x8] sm:$0xff]
    %v47 = vld [vmem:[#allocation2 + $0x10] sm:$0xff]
    %v48 = vld [vmem:[#allocation2 + $0x18] sm:$0xff]
    %v49 = vld [vmem:[#allocation2 + $0x20] sm:$0xff]
    %v50 = vld [vmem:[#allocation2 + $0x28] sm:$0xff]
    %v51 = vld [vmem:[#allocation2 + $0x30] sm:$0xff]
    %v52 = vld [vmem:[#allocation2 + $0x38] sm:$0xff]
    %v53 = vld [vmem:[#allocation2 + $0x40] sm:$0xff]
    %v54 = vld [vmem:[#allocation2 + $0x48] sm:$0xff]
    %v55 = vld [vmem:[#allocation2 + $0x50] sm:$0xff]
    %v56 = vld [vmem:[#allocation2 + $0x58] sm:$0xff]
    %v57 = vld [vmem:[#allocation2 + $0x60] sm:$0xff]
    %v58 = vld [vmem:[#allocation2 + $0x68] sm:$0xff]
    %v59 = vld [vmem:[#allocation2 + $0x70] sm:$0xff]
    %v60 = vld [vmem:[#allocation2 + $0x78] sm:$0xff]
    %v61 = vld [vmem:[#allocation2 + $0x80] sm:$0xff]
    %v62 = vld [vmem:[#allocation2 + $0x88] sm:$0xff]
    %v63 = vld [vmem:[#allocation2 + $0x90] sm:$0xff]
    %v64 = vld [vmem:[#allocation2 + $0x98] sm:$0xff]
    %v65 = vld [vmem:[#allocation2 + $0xa0] sm:$0xff]
    %v66 = vld [vmem:[#allocation2 + $0xa8] sm:$0xff]
    %v67 = vld [vmem:[#allocation2 + $0xb0] sm:$0xff]
    %v68 = vld [vmem:[#allocation2 + $0xb8] sm:$0xff]
    %v69 = vld [vmem:[#allocation2 + $0xc0] sm:$0xff]
    %v70 = vld [vmem:[#allocation2 + $0xc8] sm:$0xff]
    %v71 = vld [vmem:[#allocation2 + $0xd0] sm:$0xff]
    %v72 = vld [vmem:[#allocation2 + $0xd8] sm:$0xff]
    %v73 = vld [vmem:[#allocation2 + $0xe0] sm:$0xff]
    %v74 = vld [vmem:[#allocation2 + $0xe8] sm:$0xff]
    %v75 = vld [vmem:[#allocation2 + $0xf0] sm:$0xff]
    %v76 = vld [vmem:[#allocation2 + $0xf8] sm:$0xff]
    %v77 = vld [vmem:[#allocation2 + $0x100] sm:$0xff]
    %v78 = vld [vmem:[#allocation2 + $0x108] sm:$0xff]
    %v79 = vld [vmem:[#allocation2 + $0x110] sm:$0xff]
    %v80 = vld [vmem:[#allocation2 + $0x118] sm:$0xff]
    %v81 = vld [vmem:[#allocation2 + $0x120] sm:$0xff]
    %v82 = vld [vmem:[#allocation2 + $0x128] sm:$0xff]
    %v83 = vld [vmem:[#allocation2 + $0x130] sm:$0xff]
    %v84 = vld [vmem:[#allocation2 + $0x138] sm:$0xff]
    %v85 = vld [vmem:[#allocation2 + $0x140] sm:$0xff]
    %v86 = vld [vmem:[#allocation2 + $0x148] sm:$0xff]
    %v87 = vld [vmem:[#allocation2 + $0x150] sm:$0xff]
    %v88 = vld [vmem:[#allocation2 + $0x158] sm:$0xff]
    %v89 = vld [vmem:[#allocation2 + $0x160] sm:$0xff]
    %v90 = vld [vmem:[#allocation2 + $0x168] sm:$0xff]
    %v91 = vld [vmem:[#allocation2 + $0x170] sm:$0xff]
    %v92 = vld [vmem:[#allocation2 + $0x178] sm:$0xff]
    %v93 = vld [vmem:[#allocation2 + $0x180] sm:$0xff]
    %v94 = vld [vmem:[#allocation2 + $0x188] sm:$0xff]
    %v95 = vld [vmem:[#allocation2 + $0x190] sm:$0xff]
    %v96 = vld [vmem:[#allocation2 + $0x198] sm:$0xff]
    %v97 = vld [vmem:[#allocation2 + $0x1a0] sm:$0xff]
    %v98 = vld [vmem:[#allocation2 + $0x1a8] sm:$0xff]
    %v99 = vld [vmem:[#allocation2 + $0x1b0] sm:$0xff]
    %v100 = vld [vmem:[#allocation2 + $0x1b8] sm:$0xff]
    %v101 = vld [vmem:[#allocation2 + $0x1c0] sm:$0xff]
    %v102 = vld [vmem:[#allocation2 + $0x1c8] sm:$0xff]
    %v103 = vld [vmem:[#allocation2 + $0x1d0] sm:$0xff]
    %v104 = vld [vmem:[#allocation2 + $0x1d8] sm:$0xff]
    %v105 = vld [vmem:[#allocation2 + $0x1e0] sm:$0xff]
    %v106 = vld [vmem:[#allocation2 + $0x1e8] sm:$0xff]
    %v107 = vld [vmem:[#allocation2 + $0x1f0] sm:$0xff]
    %v108 = vld [vmem:[#allocation2 + $0x1f8] sm:$0xff]
    %v109 = vld [vmem:[#allocation2 + $0x200] sm:$0xff]
    %v110 = vld [vmem:[#allocation2 + $0x208] sm:$0xff]
    %v111 = vld [vmem:[#allocation2 + $0x210] sm:$0xff]
    %v112 = vld [vmem:[#allocation2 + $0x218] sm:$0xff]
    %v113 = vld [vmem:[#allocation2 + $0x220] sm:$0xff]
    %v114 = vld [vmem:[#allocation2 + $0x228] sm:$0xff]
    %v115 = vld [vmem:[#allocation2 + $0x230] sm:$0xff]
    %v116 = vld [vmem:[#allocation2 + $0x238] sm:$0xff]
    %v117 = vld [vmem:[#allocation2 + $0x240] sm:$0xff]
    %v118 = vld [vmem:[#allocation2 + $0x248] sm:$0xff]
    %v119 = vld [vmem:[#allocation2 + $0x250] sm:$0xff]
    %v120 = vld [vmem:[#allocation2 + $0x258] sm:$0xff]
    %v121 = vld [vmem:[#allocation2 + $0x260] sm:$0xff]
    %v122 = vld [vmem:[#allocation2 + $0x268] sm:$0xff]
    %v123 = vld [vmem:[#allocation2 + $0x270] sm:$0xff]
    %v124 = vld [vmem:[#allocation2 + $0x278] sm:$0xff]
    %v125 = vld [vmem:[#allocation2 + $0x280] sm:$0xff]
    %v126 = vld [vmem:[#allocation2 + $0x288] sm:$0xff]
    %v127 = vld [vmem:[#allocation2 + $0x290] sm:$0xff]
    %v128 = vld [vmem:[#allocation2 + $0x298] sm:$0xff]
    %v129 = vld [vmem:[#allocation2 + $0x2a0] sm:$0xff]
    %v130 = vld [vmem:[#allocation2 + $0x2a8] sm:$0xff]
    %v131 = vld [vmem:[#allocation2 + $0x2b0] sm:$0xff]
    %v132 = vld [vmem:[#allocation2 + $0x2b8] sm:$0xff]
    %v133 = vld [vmem:[#allocation2 + $0x2c0] sm:$0xff]
    %v134 = vld [vmem:[#allocation2 + $0x2c8] sm:$0xff]
    %v135 = vld [vmem:[#allocation2 + $0x2d0] sm:$0xff]
    %v136 = vld [vmem:[#allocation2 + $0x2d8] sm:$0xff]
    %v137 = vld [vmem:[#allocation2 + $0x2e0] sm:$0xff]
    %v138 = vld [vmem:[#allocation2 + $0x2e8] sm:$0xff]
    %v139 = vld [vmem:[#allocation2 + $0x2f0] sm:$0xff]
    %v140 = vld [vmem:[#allocation2 + $0x2f8] sm:$0xff]
    %v141 = vld [vmem:[#allocation2 + $0x300] sm:$0xff]
    %v142 = vld [vmem:[#allocation2 + $0x308] sm:$0xff]
    %v143 = vld [vmem:[#allocation2 + $0x310] sm:$0xff]
    %v144 = vld [vmem:[#allocation2 + $0x318] sm:$0xff]
    %v145 = vld [vmem:[#allocation2 + $0x320] sm:$0xff]
    %v146 = vld [vmem:[#allocation2 + $0x328] sm:$0xff]
    %v147 = vld [vmem:[#allocation2 + $0x330] sm:$0xff]
    %v148 = vld [vmem:[#allocation2 + $0x338] sm:$0xff]
    %v149 = vld [vmem:[#allocation2 + $0x340] sm:$0xff]
    %v150 = vld [vmem:[#allocation2 + $0x348] sm:$0xff]
    %v151 = vld [vmem:[#allocation2 + $0x350] sm:$0xff]
    %v152 = vld [vmem:[#allocation2 + $0x358] sm:$0xff]
    %v153 = vld [vmem:[#allocation2 + $0x360] sm:$0xff]
    %v154 = vld [vmem:[#allocation2 + $0x368] sm:$0xff]
    %v155 = vld [vmem:[#allocation2 + $0x370] sm:$0xff]
    %v156 = vld [vmem:[#allocation2 + $0x378] sm:$0xff]
    %v157 = vld [vmem:[#allocation2 + $0x380] sm:$0xff]
    %v158 = vld [vmem:[#allocation2 + $0x388] sm:$0xff]
    %v159 = vld [vmem:[#allocation2 + $0x390] sm:$0xff]
    %v160 = vld [vmem:[#allocation2 + $0x398] sm:$0xff]
    %v161 = vld [vmem:[#allocation2 + $0x3a0] sm:$0xff]
    %v162 = vld [vmem:[#allocation2 + $0x3a8] sm:$0xff]
    %v163 = vld [vmem:[#allocation2 + $0x3b0] sm:$0xff]
    %v164 = vld [vmem:[#allocation2 + $0x3b8] sm:$0xff]
    %v165 = vld [vmem:[#allocation2 + $0x3c0] sm:$0xff]
    %v166 = vld [vmem:[#allocation2 + $0x3c8] sm:$0xff]
    %v167 = vld [vmem:[#allocation2 + $0x3d0] sm:$0xff]
    %v168 = vld [vmem:[#allocation2 + $0x3d8] sm:$0xff]
    %v169 = vld [vmem:[#allocation2 + $0x3e0] sm:$0xff]
    %v170 = vadd.f32 %v45, %v46
    %v171 = vadd.f32 %v170, %v47
    %v172 = vadd.f32 %v171, %v48
    %v173 = vadd.f32 %v172, %v49
    %v174 = vadd.f32 %v173, %v50
    %v175 = vadd.f32 %v174, %v51
    %v176 = vadd.f32 %v175, %v52
    %v177 = vadd.f32 %v176, %v53
    %v178 = vadd.f32 %v177, %v54
    %v179 = vadd.f32 %v178, %v55
    %v180 = vadd.f32 %v179, %v56
    %v181 = vadd.f32 %v180, %v57
    %v182 = vadd.f32 %v181, %v58
    %v183 = vadd.f32 %v182, %v59
    %v184 = vadd.f32 %v183, %v60
    %v185 = vadd.f32 %v184, %v61
    %v186 = vadd.f32 %v185, %v62
    %v187 = vadd.f32 %v186, %v63
    %v188 = vadd.f32 %v187, %v64
    %v189 = vadd.f32 %v188, %v65
    %v190 = vadd.f32 %v189, %v66
    %v191 = vadd.f32 %v190, %v67
    %v192 = vadd.f32 %v191, %v68
    %v193 = vadd.f32 %v192, %v69
    %v194 = vadd.f32 %v193, %v70
    %v195 = vadd.f32 %v194, %v71
    %v196 = vadd.f32 %v195, %v72
    %v197 = vadd.f32 %v196, %v73
    %v198 = vadd.f32 %v197, %v74
    %v199 = vadd.f32 %v198, %v75
    %v200 = vadd.f32 %v199, %v76
    %v201 = vadd.f32 %v200, %v77
    %v202 = vadd.f32 %v201, %v78
    %v203 = vadd.f32 %v202, %v79
    %v204 = vadd.f32 %v203, %v80
    %v205 = vadd.f32 %v204, %v81
    %v206 = vadd.f32 %v205, %v82
    %v207 = vadd.f32 %v206, %v83
    %v208 = vadd.f32 %v207, %v84
    %v209 = vadd.f32 %v208, %v85
    %v210 = vadd.f32 %v209, %v86
    %v211 = vadd.f32 %v210, %v87
    %v212 = vadd.f32 %v211, %v88
    %v213 = vadd.f32 %v212, %v89
    %v214 = vadd.f32 %v213, %v90
    %v215 = vadd.f32 %v214, %v91
    %v216 = vadd.f32 %v215, %v92
    %v217 = vadd.f32 %v216, %v93
    %v218 = vadd.f32 %v217, %v94
    %v219 = vadd.f32 %v218, %v95
    %v220 = vadd.f32 %v219, %v96
    %v221 = vadd.f32 %v220, %v97
    %v222 = vadd.f32 %v221, %v98
    %v223 = vadd.f32 %v222, %v99
    %v224 = vadd.f32 %v223, %v100
    %v225 = vadd.f32 %v224, %v101
    %v226 = vadd.f32 %v225, %v102
    %v227 = vadd.f32 %v226, %v103
    %v228 = vadd.f32 %v227, %v104
    %v229 = vadd.f32 %v228, %v105
    %v230 = vadd.f32 %v229, %v106
    %v231 = vadd.f32 %v230, %v107
    %v232 = vadd.f32 %v231, %v108
    %v233 = vadd.f32 %v232, %v109
    %v234 = vadd.f32 %v233, %v110
    %v235 = vadd.f32 %v234, %v111
    %v236 = vadd.f32 %v235, %v112
    %v237 = vadd.f32 %v236, %v113
    %v238 = vadd.f32 %v237, %v114
    %v239 = vadd.f32 %v238, %v115
    %v240 = vadd.f32 %v239, %v116
    %v241 = vadd.f32 %v240, %v117
    %v242 = vadd.f32 %v241, %v118
    %v243 = vadd.f32 %v242, %v119
    %v244 = vadd.f32 %v243, %v120
    %v245 = vadd.f32 %v244, %v121
    %v246 = vadd.f32 %v245, %v122
    %v247 = vadd.f32 %v246, %v123
    %v248 = vadd.f32 %v247, %v124
    %v249 = vadd.f32 %v248, %v125
    %v250 = vadd.f32 %v249, %v126
    %v251 = vadd.f32 %v250, %v127
    %v252 = vadd.f32 %v251, %v128
    %v253 = vadd.f32 %v252, %v129
    %v254 = vadd.f32 %v253, %v130
    %v255 = vadd.f32 %v254, %v131
    %v256 = vadd.f32 %v255, %v132
    %v257 = vadd.f32 %v256, %v133
    %v258 = vadd.f32 %v257, %v134
    %v259 = vadd.f32 %v258, %v135
    %v260 = vadd.f32 %v259, %v136
    %v261 = vadd.f32 %v260, %v137
    %v262 = vadd.f32 %v261, %v138
    %v263 = vadd.f32 %v262, %v139
    %v264 = vadd.f32 %v263, %v140
    %v265 = vadd.f32 %v264, %v141
    %v266 = vadd.f32 %v265, %v142
    %v267 = vadd.f32 %v266, %v143
    %v268 = vadd.f32 %v267, %v144
    %v269 = vadd.f32 %v268, %v145
    %v270 = vadd.f32 %v269, %v146
    %v271 = vadd.f32 %v270, %v147
    %v272 = vadd.f32 %v271, %v148
    %v273 = vadd.f32 %v272, %v149
    %v274 = vadd.f32 %v273, %v150
    %v275 = vadd.f32 %v274, %v151
    %v276 = vadd.f32 %v275, %v152
    %v277 = vadd.f32 %v276, %v153
    %v278 = vadd.f32 %v277, %v154
    %v279 = vadd.f32 %v278, %v155
    %v280 = vadd.f32 %v279, %v156
    %v281 = vadd.f32 %v280, %v157
    %v282 = vadd.f32 %v281, %v158
    %v283 = vadd.f32 %v282, %v159
    %v284 = vadd.f32 %v283, %v160
    %v285 = vadd.f32 %v284, %v161
    %v286 = vadd.f32 %v285, %v162
    %v287 = vadd.f32 %v286, %v163
    %v288 = vadd.f32 %v287, %v164
    %v289 = vadd.f32 %v288, %v165
    %v290 = vadd.f32 %v289, %v166
    %v291 = vadd.f32 %v290, %v167
    %v292 = vadd.f32 %v291, %v168
    %v293 = vadd.f32 %v292, %v169
    %v294 = vrot.slane %v293, 4
    %v295 = vadd.f32 %v293, %v294
    %v296 = vrot.slane %v295, 2
    %v297 = vadd.f32 %v295, %v296
    %v298 = vrot.slane %v297, 1
    %v299 = vadd.f32 %v297, %v298
    %v300 = vmul.f32 %v299, 0.001
    %301 = vst [vmem:[#allocation7] sm:$0x1] %v300
    %v302 = vld [vmem:[#allocation5] sm:$0xff]
    %v303 = vld [vmem:[#allocation5 + $0x8] sm:$0xff]
    %v304 = vld [vmem:[#allocation5 + $0x10] sm:$0xff]
    %v305 = vld [vmem:[#allocation5 + $0x18] sm:$0xff]
    %v306 = vld [vmem:[#allocation5 + $0x20] sm:$0xff]
    %v307 = vld [vmem:[#allocation5 + $0x28] sm:$0xff]
    %v308 = vld [vmem:[#allocation5 + $0x30] sm:$0xff]
    %v309 = vld [vmem:[#allocation5 + $0x38] sm:$0xff]
    %v310 = vld [vmem:[#allocation5 + $0x40] sm:$0xff]
    %v311 = vld [vmem:[#allocation5 + $0x48] sm:$0xff]
    %v312 = vld [vmem:[#allocation5 + $0x50] sm:$0xff]
    %v313 = vld [vmem:[#allocation5 + $0x58] sm:$0xff]
    %v314 = vld [vmem:[#allocation5 + $0x60] sm:$0xff]
    %v315 = vld [vmem:[#allocation5 + $0x68] sm:$0xff]
    %v316 = vld [vmem:[#allocation5 + $0x70] sm:$0xff]
    %v317 = vld [vmem:[#allocation5 + $0x78] sm:$0xff]
    %318 = vmatprep.subr.mxu0 0.0
    %319 = vmatpush1.msra.mxu0 %v302
    %320 = vmatprep.subr.mxu0 0.0
    %321 = vmatpush1.msra.mxu0 %v303
    %322 = vmatprep.subr.mxu0 0.0
    %323 = vmatpush1.msra.mxu0 %v304
    %324 = vmatprep.subr.mxu0 0.0
    %325 = vmatpush1.msra.mxu0 %v305
    %326 = vmatprep.subr.mxu0 0.0
    %327 = vmatpush1.msra.mxu0 %v306
    %328 = vmatprep.subr.mxu0 0.0
    %329 = vmatpush1.msra.mxu0 %v307
    %330 = vmatprep.subr.mxu0 0.0
    %331 = vmatpush1.msra.mxu0 %v308
    %332 = vmatprep.subr.mxu0 0.0
    %333 = vmatpush1.msra.mxu0 %v309
    %334 = vmatprep.subr.mxu0 0.0
    %335 = vmatpush1.msra.mxu0 %v310
    %336 = vmatprep.subr.mxu0 0.0
    %337 = vmatpush1.msra.mxu0 %v311
    %338 = vmatprep.subr.mxu0 0.0
    %339 = vmatpush1.msra.mxu0 %v312
    %340 = vmatprep.subr.mxu0 0.0
    %341 = vmatpush1.msra.mxu0 %v313
    %342 = vmatprep.subr.mxu0 0.0
    %343 = vmatpush1.msra.mxu0 %v314
    %344 = vmatprep.subr.mxu0 0.0
    %345 = vmatpush1.msra.mxu0 %v315
    %346 = vmatprep.subr.mxu0 0.0
    %347 = vmatpush1.msra.mxu0 %v316
    %348 = vmatprep.subr.mxu0 0.0
    %349 = vmatpush1.msra.mxu0 %v317
    %350 = vmatprep.subr.mxu0 0.0
    %351 = vmatpush1.msra.mxu0 0.0
    %352 = vmatprep.subr.mxu0 0.0
    %353 = vmatpush1.msra.mxu0 0.0
    %354 = vmatprep.subr.mxu0 0.0
    %355 = vmatpush1.msra.mxu0 0.0
    %356 = vmatprep.subr.mxu0 0.0
    %357 = vmatpush1.msra.mxu0 0.0
    %358 = vmatprep.subr.mxu0 0.0
    %359 = vmatpush1.msra.mxu0 0.0
    %360 = vmatprep.subr.mxu0 0.0
    %361 = vmatpush1.msra.mxu0 0.0
    %362 = vmatprep.subr.mxu0 0.0
    %363 = vmatpush1.msra.mxu0 0.0
    %364 = vmatprep.subr.mxu0 0.0
    %365 = vmatpush1.msra.mxu0 0.0
    %366 = vmatprep.subr.mxu0 0.0
    %367 = vmatpush1.msra.mxu0 0.0
    %368 = vmatprep.subr.mxu0 0.0
    %369 = vmatpush1.msra.mxu0 0.0
    %370 = vmatprep.subr.mxu0 0.0
    %371 = vmatpush1.msra.mxu0 0.0
    %372 = vmatprep.subr.mxu0 0.0
    %373 = vmatpush1.msra.mxu0 0.0
    %374 = vmatprep.subr.mxu0 0.0
    %375 = vmatpush1.msra.mxu0 0.0
    %376 = vmatprep.subr.mxu0 0.0
    %377 = vmatpush1.msra.mxu0 0.0
    %378 = vmatprep.subr.mxu0 0.0
    %379 = vmatpush1.msra.mxu0 0.0
    %380 = vmatprep.subr.mxu0 0.0
    %381 = vmatpush1.msra.mxu0 0.0
    %382 = vmatprep.mubr.f32.mxu0 0.0
    %383 = vmatmul.mubr.f32.gmra.mrb[0].mxu0 %v300
    %v384 = vpop.f32.mrb[0].mxu0
    %v385 = vadd.f32 0.0, %v384
    %v386 = vpop.f32.mrb[0].mxu0
    %387 = vdwg.mxu0
    %v388 = vld [vmem:[%s2] sm:$0x1]
    %v389 = vmul.f32 %v388, %v300
    %vm390 = vcmask 1040384
    %v391 = vsel %vm390, %v389, 0.0
    %392 = vadd.xlane.f32.xlu0 %v391
    %v393 = vpop.xlane.xlu0 %392
    %v394 = vlaneseq
    %v395 = vshrl.u32 %v394, 7
    %v396 = vsub.s32 0, %v395
    %v397 = vrot.slane %v385, %v396
    %v398 = vmul.f32 %v45, %v397
    %v399 = vmul.f32 %v46, %v397
    %v400 = vmul.f32 %v47, %v397
    %v401 = vmul.f32 %v48, %v397
    %v402 = vmul.f32 %v49, %v397
    %v403 = vmul.f32 %v50, %v397
    %v404 = vmul.f32 %v51, %v397
    %v405 = vmul.f32 %v52, %v397
    %v406 = vmul.f32 %v53, %v397
    %v407 = vmul.f32 %v54, %v397
    %v408 = vmul.f32 %v55, %v397
    %v409 = vmul.f32 %v56, %v397
    %v410 = vmul.f32 %v57, %v397
    %v411 = vmul.f32 %v58, %v397
    %v412 = vmul.f32 %v59, %v397
    %v413 = vmul.f32 %v60, %v397
    %v414 = vmul.f32 %v61, %v397
    %v415 = vmul.f32 %v62, %v397
    %v416 = vmul.f32 %v63, %v397
    %v417 = vmul.f32 %v64, %v397
    %v418 = vmul.f32 %v65, %v397
    %v419 = vmul.f32 %v66, %v397
    %v420 = vmul.f32 %v67, %v397
    %v421 = vmul.f32 %v68, %v397
    %v422 = vmul.f32 %v69, %v397
    %v423 = vmul.f32 %v70, %v397
    %v424 = vmul.f32 %v71, %v397
    %v425 = vmul.f32 %v72, %v397
    %v426 = vmul.f32 %v73, %v397
    %v427 = vmul.f32 %v74, %v397
    %v428 = vmul.f32 %v75, %v397
    %v429 = vmul.f32 %v76, %v397
    %v430 = vmul.f32 %v77, %v397
    %v431 = vmul.f32 %v78, %v397
    %v432 = vmul.f32 %v79, %v397
    %v433 = vmul.f32 %v80, %v397
    %v434 = vmul.f32 %v81, %v397
    %v435 = vmul.f32 %v82, %v397
    %v436 = vmul.f32 %v83, %v397
    %v437 = vmul.f32 %v84, %v397
    %v438 = vmul.f32 %v85, %v397
    %v439 = vmul.f32 %v86, %v397
    %v440 = vmul.f32 %v87, %v397
    %v441 = vmul.f32 %v88, %v397
    %v442 = vmul.f32 %v89, %v397
    %v443 = vmul.f32 %v90, %v397
    %v444 = vmul.f32 %v91, %v397
    %v445 = vmul.f32 %v92, %v397
    %v446 = vmul.f32 %v93, %v397
    %v447 = vmul.f32 %v94, %v397
    %v448 = vmul.f32 %v95, %v397
    %v449 = vmul.f32 %v96, %v397
    %v450 = vmul.f32 %v97, %v397
    %v451 = vmul.f32 %v98, %v397
    %v452 = vmul.f32 %v99, %v397
    %v453 = vmul.f32 %v100, %v397
    %v454 = vmul.f32 %v101, %v397
    %v455 = vmul.f32 %v102, %v397
    %v456 = vmul.f32 %v103, %v397
    %v457 = vmul.f32 %v104, %v397
    %v458 = vmul.f32 %v105, %v397
    %v459 = vmul.f32 %v106, %v397
    %v460 = vmul.f32 %v107, %v397
    %v461 = vmul.f32 %v108, %v397
    %v462 = vmul.f32 %v109, %v397
    %v463 = vmul.f32 %v110, %v397
    %v464 = vmul.f32 %v111, %v397
    %v465 = vmul.f32 %v112, %v397
    %v466 = vmul.f32 %v113, %v397
    %v467 = vmul.f32 %v114, %v397
    %v468 = vmul.f32 %v115, %v397
    %v469 = vmul.f32 %v116, %v397
    %v470 = vmul.f32 %v117, %v397
    %v471 = vmul.f32 %v118, %v397
    %v472 = vmul.f32 %v119, %v397
    %v473 = vmul.f32 %v120, %v397
    %v474 = vmul.f32 %v121, %v397
    %v475 = vmul.f32 %v122, %v397
    %v476 = vmul.f32 %v123, %v397
    %v477 = vmul.f32 %v124, %v397
    %v478 = vmul.f32 %v125, %v397
    %v479 = vmul.f32 %v126, %v397
    %v480 = vmul.f32 %v127, %v397
    %v481 = vmul.f32 %v128, %v397
    %v482 = vmul.f32 %v129, %v397
    %v483 = vmul.f32 %v130, %v397
    %v484 = vmul.f32 %v131, %v397
    %v485 = vmul.f32 %v132, %v397
    %v486 = vmul.f32 %v133, %v397
    %v487 = vmul.f32 %v134, %v397
    %v488 = vmul.f32 %v135, %v397
    %v489 = vmul.f32 %v136, %v397
    %v490 = vmul.f32 %v137, %v397
    %v491 = vmul.f32 %v138, %v397
    %v492 = vmul.f32 %v139, %v397
    %v493 = vmul.f32 %v140, %v397
    %v494 = vmul.f32 %v141, %v397
    %v495 = vmul.f32 %v142, %v397
    %v496 = vmul.f32 %v143, %v397
    %v497 = vmul.f32 %v144, %v397
    %v498 = vmul.f32 %v145, %v397
    %v499 = vmul.f32 %v146, %v397
    %v500 = vmul.f32 %v147, %v397
    %v501 = vmul.f32 %v148, %v397
    %v502 = vmul.f32 %v149, %v397
    %v503 = vmul.f32 %v150, %v397
    %v504 = vmul.f32 %v151, %v397
    %v505 = vmul.f32 %v152, %v397
    %v506 = vmul.f32 %v153, %v397
    %v507 = vmul.f32 %v154, %v397
    %v508 = vmul.f32 %v155, %v397
    %v509 = vmul.f32 %v156, %v397
    %v510 = vmul.f32 %v157, %v397
    %v511 = vmul.f32 %v158, %v397
    %v512 = vmul.f32 %v159, %v397
    %v513 = vmul.f32 %v160, %v397
    %v514 = vmul.f32 %v161, %v397
    %v515 = vmul.f32 %v162, %v397
    %v516 = vmul.f32 %v163, %v397
    %v517 = vmul.f32 %v164, %v397
    %v518 = vmul.f32 %v165, %v397
    %v519 = vmul.f32 %v166, %v397
    %v520 = vmul.f32 %v167, %v397
    %v521 = vmul.f32 %v168, %v397
    %v522 = vmul.f32 %v169, %v397
    %523 = vadd.xlane.f32.xlu0 %v398
    %v524 = vpop.xlane.xlu0 %523
    %525 = vadd.xlane.f32.xlu0 %v399
    %v526 = vpop.xlane.xlu0 %525
    %527 = vadd.xlane.f32.xlu0 %v400
    %v528 = vpop.xlane.xlu0 %527
    %529 = vadd.xlane.f32.xlu0 %v401
    %v530 = vpop.xlane.xlu0 %529
    %531 = vadd.xlane.f32.xlu0 %v402
    %v532 = vpop.xlane.xlu0 %531
    %533 = vadd.xlane.f32.xlu0 %v403
    %v534 = vpop.xlane.xlu0 %533
    %535 = vadd.xlane.f32.xlu0 %v404
    %v536 = vpop.xlane.xlu0 %535
    %537 = vadd.xlane.f32.xlu0 %v405
    %v538 = vpop.xlane.xlu0 %537
    %539 = vadd.xlane.f32.xlu0 %v406
    %v540 = vpop.xlane.xlu0 %539
    %541 = vadd.xlane.f32.xlu0 %v407
    %v542 = vpop.xlane.xlu0 %541
    %543 = vadd.xlane.f32.xlu0 %v408
    %v544 = vpop.xlane.xlu0 %543
    %545 = vadd.xlane.f32.xlu0 %v409
    %v546 = vpop.xlane.xlu0 %545
    %547 = vadd.xlane.f32.xlu0 %v410
    %v548 = vpop.xlane.xlu0 %547
    %549 = vadd.xlane.f32.xlu0 %v411
    %v550 = vpop.xlane.xlu0 %549
    %551 = vadd.xlane.f32.xlu0 %v412
    %v552 = vpop.xlane.xlu0 %551
    %553 = vadd.xlane.f32.xlu0 %v413
    %v554 = vpop.xlane.xlu0 %553
    %555 = vadd.xlane.f32.xlu0 %v414
    %v556 = vpop.xlane.xlu0 %555
    %557 = vadd.xlane.f32.xlu0 %v415
    %v558 = vpop.xlane.xlu0 %557
    %559 = vadd.xlane.f32.xlu0 %v416
    %v560 = vpop.xlane.xlu0 %559
    %561 = vadd.xlane.f32.xlu0 %v417
    %v562 = vpop.xlane.xlu0 %561
    %563 = vadd.xlane.f32.xlu0 %v418
    %v564 = vpop.xlane.xlu0 %563
    %565 = vadd.xlane.f32.xlu0 %v419
    %v566 = vpop.xlane.xlu0 %565
    %567 = vadd.xlane.f32.xlu0 %v420
    %v568 = vpop.xlane.xlu0 %567
    %569 = vadd.xlane.f32.xlu0 %v421
    %v570 = vpop.xlane.xlu0 %569
    %571 = vadd.xlane.f32.xlu0 %v422
    %v572 = vpop.xlane.xlu0 %571
    %573 = vadd.xlane.f32.xlu0 %v423
    %v574 = vpop.xlane.xlu0 %573
    %575 = vadd.xlane.f32.xlu0 %v424
    %v576 = vpop.xlane.xlu0 %575
    %577 = vadd.xlane.f32.xlu0 %v425
    %v578 = vpop.xlane.xlu0 %577
    %579 = vadd.xlane.f32.xlu0 %v426
    %v580 = vpop.xlane.xlu0 %579
    %581 = vadd.xlane.f32.xlu0 %v427
    %v582 = vpop.xlane.xlu0 %581
    %583 = vadd.xlane.f32.xlu0 %v428
    %v584 = vpop.xlane.xlu0 %583
    %585 = vadd.xlane.f32.xlu0 %v429
    %v586 = vpop.xlane.xlu0 %585
    %587 = vadd.xlane.f32.xlu0 %v430
    %v588 = vpop.xlane.xlu0 %587
    %589 = vadd.xlane.f32.xlu0 %v431
    %v590 = vpop.xlane.xlu0 %589
    %591 = vadd.xlane.f32.xlu0 %v432
    %v592 = vpop.xlane.xlu0 %591
    %593 = vadd.xlane.f32.xlu0 %v433
    %v594 = vpop.xlane.xlu0 %593
    %595 = vadd.xlane.f32.xlu0 %v434
    %v596 = vpop.xlane.xlu0 %595
    %597 = vadd.xlane.f32.xlu0 %v435
    %v598 = vpop.xlane.xlu0 %597
    %599 = vadd.xlane.f32.xlu0 %v436
    %v600 = vpop.xlane.xlu0 %599
    %601 = vadd.xlane.f32.xlu0 %v437
    %v602 = vpop.xlane.xlu0 %601
    %603 = vadd.xlane.f32.xlu0 %v438
    %v604 = vpop.xlane.xlu0 %603
    %605 = vadd.xlane.f32.xlu0 %v439
    %v606 = vpop.xlane.xlu0 %605
    %607 = vadd.xlane.f32.xlu0 %v440
    %v608 = vpop.xlane.xlu0 %607
    %609 = vadd.xlane.f32.xlu0 %v441
    %v610 = vpop.xlane.xlu0 %609
    %611 = vadd.xlane.f32.xlu0 %v442
    %v612 = vpop.xlane.xlu0 %611
    %613 = vadd.xlane.f32.xlu0 %v443
    %v614 = vpop.xlane.xlu0 %613
    %615 = vadd.xlane.f32.xlu0 %v444
    %v616 = vpop.xlane.xlu0 %615
    %617 = vadd.xlane.f32.xlu0 %v445
    %v618 = vpop.xlane.xlu0 %617
    %619 = vadd.xlane.f32.xlu0 %v446
    %v620 = vpop.xlane.xlu0 %619
    %621 = vadd.xlane.f32.xlu0 %v447
    %v622 = vpop.xlane.xlu0 %621
    %623 = vadd.xlane.f32.xlu0 %v448
    %v624 = vpop.xlane.xlu0 %623
    %625 = vadd.xlane.f32.xlu0 %v449
    %v626 = vpop.xlane.xlu0 %625
    %627 = vadd.xlane.f32.xlu0 %v450
    %v628 = vpop.xlane.xlu0 %627
    %629 = vadd.xlane.f32.xlu0 %v451
    %v630 = vpop.xlane.xlu0 %629
    %631 = vadd.xlane.f32.xlu0 %v452
    %v632 = vpop.xlane.xlu0 %631
    %633 = vadd.xlane.f32.xlu0 %v453
    %v634 = vpop.xlane.xlu0 %633
    %635 = vadd.xlane.f32.xlu0 %v454
    %v636 = vpop.xlane.xlu0 %635
    %637 = vadd.xlane.f32.xlu0 %v455
    %v638 = vpop.xlane.xlu0 %637
    %639 = vadd.xlane.f32.xlu0 %v456
    %v640 = vpop.xlane.xlu0 %639
    %641 = vadd.xlane.f32.xlu0 %v457
    %v642 = vpop.xlane.xlu0 %641
    %643 = vadd.xlane.f32.xlu0 %v458
    %v644 = vpop.xlane.xlu0 %643
    %645 = vadd.xlane.f32.xlu0 %v459
    %v646 = vpop.xlane.xlu0 %645
    %647 = vadd.xlane.f32.xlu0 %v460
    %v648 = vpop.xlane.xlu0 %647
    %649 = vadd.xlane.f32.xlu0 %v461
    %v650 = vpop.xlane.xlu0 %649
    %651 = vadd.xlane.f32.xlu0 %v462
    %v652 = vpop.xlane.xlu0 %651
    %653 = vadd.xlane.f32.xlu0 %v463
    %v654 = vpop.xlane.xlu0 %653
    %655 = vadd.xlane.f32.xlu0 %v464
    %v656 = vpop.xlane.xlu0 %655
    %657 = vadd.xlane.f32.xlu0 %v465
    %v658 = vpop.xlane.xlu0 %657
    %659 = vadd.xlane.f32.xlu0 %v466
    %v660 = vpop.xlane.xlu0 %659
    %661 = vadd.xlane.f32.xlu0 %v467
    %v662 = vpop.xlane.xlu0 %661
    %663 = vadd.xlane.f32.xlu0 %v468
    %v664 = vpop.xlane.xlu0 %663
    %665 = vadd.xlane.f32.xlu0 %v469
    %v666 = vpop.xlane.xlu0 %665
    %667 = vadd.xlane.f32.xlu0 %v470
    %v668 = vpop.xlane.xlu0 %667
    %669 = vadd.xlane.f32.xlu0 %v471
    %v670 = vpop.xlane.xlu0 %669
    %671 = vadd.xlane.f32.xlu0 %v472
    %v672 = vpop.xlane.xlu0 %671
    %673 = vadd.xlane.f32.xlu0 %v473
    %v674 = vpop.xlane.xlu0 %673
    %675 = vadd.xlane.f32.xlu0 %v474
    %v676 = vpop.xlane.xlu0 %675
    %677 = vadd.xlane.f32.xlu0 %v475
    %v678 = vpop.xlane.xlu0 %677
    %679 = vadd.xlane.f32.xlu0 %v476
    %v680 = vpop.xlane.xlu0 %679
    %681 = vadd.xlane.f32.xlu0 %v477
    %v682 = vpop.xlane.xlu0 %681
    %683 = vadd.xlane.f32.xlu0 %v478
    %v684 = vpop.xlane.xlu0 %683
    %685 = vadd.xlane.f32.xlu0 %v479
    %v686 = vpop.xlane.xlu0 %685
    %687 = vadd.xlane.f32.xlu0 %v480
    %v688 = vpop.xlane.xlu0 %687
    %689 = vadd.xlane.f32.xlu0 %v481
    %v690 = vpop.xlane.xlu0 %689
    %691 = vadd.xlane.f32.xlu0 %v482
    %v692 = vpop.xlane.xlu0 %691
    %693 = vadd.xlane.f32.xlu0 %v483
    %v694 = vpop.xlane.xlu0 %693
    %695 = vadd.xlane.f32.xlu0 %v484
    %v696 = vpop.xlane.xlu0 %695
    %697 = vadd.xlane.f32.xlu0 %v485
    %v698 = vpop.xlane.xlu0 %697
    %699 = vadd.xlane.f32.xlu0 %v486
    %v700 = vpop.xlane.xlu0 %699
    %701 = vadd.xlane.f32.xlu0 %v487
    %v702 = vpop.xlane.xlu0 %701
    %703 = vadd.xlane.f32.xlu0 %v488
    %v704 = vpop.xlane.xlu0 %703
    %705 = vadd.xlane.f32.xlu0 %v489
    %v706 = vpop.xlane.xlu0 %705
    %707 = vadd.xlane.f32.xlu0 %v490
    %v708 = vpop.xlane.xlu0 %707
    %709 = vadd.xlane.f32.xlu0 %v491
    %v710 = vpop.xlane.xlu0 %709
    %711 = vadd.xlane.f32.xlu0 %v492
    %v712 = vpop.xlane.xlu0 %711
    %713 = vadd.xlane.f32.xlu0 %v493
    %v714 = vpop.xlane.xlu0 %713
    %715 = vadd.xlane.f32.xlu0 %v494
    %v716 = vpop.xlane.xlu0 %715
    %717 = vadd.xlane.f32.xlu0 %v495
    %v718 = vpop.xlane.xlu0 %717
    %719 = vadd.xlane.f32.xlu0 %v496
    %v720 = vpop.xlane.xlu0 %719
    %721 = vadd.xlane.f32.xlu0 %v497
    %v722 = vpop.xlane.xlu0 %721
    %723 = vadd.xlane.f32.xlu0 %v498
    %v724 = vpop.xlane.xlu0 %723
    %725 = vadd.xlane.f32.xlu0 %v499
    %v726 = vpop.xlane.xlu0 %725
    %727 = vadd.xlane.f32.xlu0 %v500
    %v728 = vpop.xlane.xlu0 %727
    %729 = vadd.xlane.f32.xlu0 %v501
    %v730 = vpop.xlane.xlu0 %729
    %731 = vadd.xlane.f32.xlu0 %v502
    %v732 = vpop.xlane.xlu0 %731
    %733 = vadd.xlane.f32.xlu0 %v503
    %v734 = vpop.xlane.xlu0 %733
    %735 = vadd.xlane.f32.xlu0 %v504
    %v736 = vpop.xlane.xlu0 %735
    %737 = vadd.xlane.f32.xlu0 %v505
    %v738 = vpop.xlane.xlu0 %737
    %739 = vadd.xlane.f32.xlu0 %v506
    %v740 = vpop.xlane.xlu0 %739
    %741 = vadd.xlane.f32.xlu0 %v507
    %v742 = vpop.xlane.xlu0 %741
    %743 = vadd.xlane.f32.xlu0 %v508
    %v744 = vpop.xlane.xlu0 %743
    %745 = vadd.xlane.f32.xlu0 %v509
    %v746 = vpop.xlane.xlu0 %745
    %747 = vadd.xlane.f32.xlu0 %v510
    %v748 = vpop.xlane.xlu0 %747
    %749 = vadd.xlane.f32.xlu0 %v511
    %v750 = vpop.xlane.xlu0 %749
    %751 = vadd.xlane.f32.xlu0 %v512
    %v752 = vpop.xlane.xlu0 %751
    %753 = vadd.xlane.f32.xlu0 %v513
    %v754 = vpop.xlane.xlu0 %753
    %755 = vadd.xlane.f32.xlu0 %v514
    %v756 = vpop.xlane.xlu0 %755
    %757 = vadd.xlane.f32.xlu0 %v515
    %v758 = vpop.xlane.xlu0 %757
    %759 = vadd.xlane.f32.xlu0 %v516
    %v760 = vpop.xlane.xlu0 %759
    %761 = vadd.xlane.f32.xlu0 %v517
    %v762 = vpop.xlane.xlu0 %761
    %763 = vadd.xlane.f32.xlu0 %v518
    %v764 = vpop.xlane.xlu0 %763
    %765 = vadd.xlane.f32.xlu0 %v519
    %v766 = vpop.xlane.xlu0 %765
    %767 = vadd.xlane.f32.xlu0 %v520
    %v768 = vpop.xlane.xlu0 %767
    %769 = vadd.xlane.f32.xlu0 %v521
    %v770 = vpop.xlane.xlu0 %769
    %771 = vadd.xlane.f32.xlu0 %v522
    %v772 = vpop.xlane.xlu0 %771
    %v773 = vlaneseq
    %v774 = vshrl.u32 %v773, 7
    %v775 = vsub.s32 0, %v774
    %v776 = vrot.slane %v393, %v775
    %v777 = vadd.f32 %v524, %v776
    %v778 = vadd.f32 %v526, %v776
    %v779 = vadd.f32 %v528, %v776
    %v780 = vadd.f32 %v530, %v776
    %v781 = vadd.f32 %v532, %v776
    %v782 = vadd.f32 %v534, %v776
    %v783 = vadd.f32 %v536, %v776
    %v784 = vadd.f32 %v538, %v776
    %v785 = vadd.f32 %v540, %v776
    %v786 = vadd.f32 %v542, %v776
    %v787 = vadd.f32 %v544, %v776
    %v788 = vadd.f32 %v546, %v776
    %v789 = vadd.f32 %v548, %v776
    %v790 = vadd.f32 %v550, %v776
    %v791 = vadd.f32 %v552, %v776
    %v792 = vadd.f32 %v554, %v776
    %v793 = vadd.f32 %v556, %v776
    %v794 = vadd.f32 %v558, %v776
    %v795 = vadd.f32 %v560, %v776
    %v796 = vadd.f32 %v562, %v776
    %v797 = vadd.f32 %v564, %v776
    %v798 = vadd.f32 %v566, %v776
    %v799 = vadd.f32 %v568, %v776
    %v800 = vadd.f32 %v570, %v776
    %v801 = vadd.f32 %v572, %v776
    %v802 = vadd.f32 %v574, %v776
    %v803 = vadd.f32 %v576, %v776
    %v804 = vadd.f32 %v578, %v776
    %v805 = vadd.f32 %v580, %v776
    %v806 = vadd.f32 %v582, %v776
    %v807 = vadd.f32 %v584, %v776
    %v808 = vadd.f32 %v586, %v776
    %v809 = vadd.f32 %v588, %v776
    %v810 = vadd.f32 %v590, %v776
    %v811 = vadd.f32 %v592, %v776
    %v812 = vadd.f32 %v594, %v776
    %v813 = vadd.f32 %v596, %v776
    %v814 = vadd.f32 %v598, %v776
    %v815 = vadd.f32 %v600, %v776
    %v816 = vadd.f32 %v602, %v776
    %v817 = vadd.f32 %v604, %v776
    %v818 = vadd.f32 %v606, %v776
    %v819 = vadd.f32 %v608, %v776
    %v820 = vadd.f32 %v610, %v776
    %v821 = vadd.f32 %v612, %v776
    %v822 = vadd.f32 %v614, %v776
    %v823 = vadd.f32 %v616, %v776
    %v824 = vadd.f32 %v618, %v776
    %v825 = vadd.f32 %v620, %v776
    %v826 = vadd.f32 %v622, %v776
    %v827 = vadd.f32 %v624, %v776
    %v828 = vadd.f32 %v626, %v776
    %v829 = vadd.f32 %v628, %v776
    %v830 = vadd.f32 %v630, %v776
    %v831 = vadd.f32 %v632, %v776
    %v832 = vadd.f32 %v634, %v776
    %v833 = vadd.f32 %v636, %v776
    %v834 = vadd.f32 %v638, %v776
    %v835 = vadd.f32 %v640, %v776
    %v836 = vadd.f32 %v642, %v776
    %v837 = vadd.f32 %v644, %v776
    %v838 = vadd.f32 %v646, %v776
    %v839 = vadd.f32 %v648, %v776
    %v840 = vadd.f32 %v650, %v776
    %v841 = vadd.f32 %v652, %v776
    %v842 = vadd.f32 %v654, %v776
    %v843 = vadd.f32 %v656, %v776
    %v844 = vadd.f32 %v658, %v776
    %v845 = vadd.f32 %v660, %v776
    %v846 = vadd.f32 %v662, %v776
    %v847 = vadd.f32 %v664, %v776
    %v848 = vadd.f32 %v666, %v776
    %v849 = vadd.f32 %v668, %v776
    %v850 = vadd.f32 %v670, %v776
    %v851 = vadd.f32 %v672, %v776
    %v852 = vadd.f32 %v674, %v776
    %v853 = vadd.f32 %v676, %v776
    %v854 = vadd.f32 %v678, %v776
    %v855 = vadd.f32 %v680, %v776
    %v856 = vadd.f32 %v682, %v776
    %v857 = vadd.f32 %v684, %v776
    %v858 = vadd.f32 %v686, %v776
    %v859 = vadd.f32 %v688, %v776
    %v860 = vadd.f32 %v690, %v776
    %v861 = vadd.f32 %v692, %v776
    %v862 = vadd.f32 %v694, %v776
    %v863 = vadd.f32 %v696, %v776
    %v864 = vadd.f32 %v698, %v776
    %v865 = vadd.f32 %v700, %v776
    %v866 = vadd.f32 %v702, %v776
    %v867 = vadd.f32 %v704, %v776
    %v868 = vadd.f32 %v706, %v776
    %v869 = vadd.f32 %v708, %v776
    %v870 = vadd.f32 %v710, %v776
    %v871 = vadd.f32 %v712, %v776
    %v872 = vadd.f32 %v714, %v776
    %v873 = vadd.f32 %v716, %v776
    %v874 = vadd.f32 %v718, %v776
    %v875 = vadd.f32 %v720, %v776
    %v876 = vadd.f32 %v722, %v776
    %v877 = vadd.f32 %v724, %v776
    %v878 = vadd.f32 %v726, %v776
    %v879 = vadd.f32 %v728, %v776
    %v880 = vadd.f32 %v730, %v776
    %v881 = vadd.f32 %v732, %v776
    %v882 = vadd.f32 %v734, %v776
    %v883 = vadd.f32 %v736, %v776
    %v884 = vadd.f32 %v738, %v776
    %v885 = vadd.f32 %v740, %v776
    %v886 = vadd.f32 %v742, %v776
    %v887 = vadd.f32 %v744, %v776
    %v888 = vadd.f32 %v746, %v776
    %v889 = vadd.f32 %v748, %v776
    %v890 = vadd.f32 %v750, %v776
    %v891 = vadd.f32 %v752, %v776
    %v892 = vadd.f32 %v754, %v776
    %v893 = vadd.f32 %v756, %v776
    %v894 = vadd.f32 %v758, %v776
    %v895 = vadd.f32 %v760, %v776
    %v896 = vadd.f32 %v762, %v776
    %v897 = vadd.f32 %v764, %v776
    %v898 = vadd.f32 %v766, %v776
    %v899 = vadd.f32 %v768, %v776
    %v900 = vadd.f32 %v770, %v776
    %v901 = vadd.f32 %v772, %v776
    %v902 = vsub.f32 0.0, %v777
    %v903 = vsub.f32 0.0, %v778
    %v904 = vsub.f32 0.0, %v779
    %v905 = vsub.f32 0.0, %v780
    %v906 = vsub.f32 0.0, %v781
    %v907 = vsub.f32 0.0, %v782
    %v908 = vsub.f32 0.0, %v783
    %v909 = vsub.f32 0.0, %v784
    %v910 = vsub.f32 0.0, %v785
    %v911 = vsub.f32 0.0, %v786
    %v912 = vsub.f32 0.0, %v787
    %v913 = vsub.f32 0.0, %v788
    %v914 = vsub.f32 0.0, %v789
    %v915 = vsub.f32 0.0, %v790
    %v916 = vsub.f32 0.0, %v791
    %v917 = vsub.f32 0.0, %v792
    %v918 = vsub.f32 0.0, %v793
    %v919 = vsub.f32 0.0, %v794
    %v920 = vsub.f32 0.0, %v795
    %v921 = vsub.f32 0.0, %v796
    %v922 = vsub.f32 0.0, %v797
    %v923 = vsub.f32 0.0, %v798
    %v924 = vsub.f32 0.0, %v799
    %v925 = vsub.f32 0.0, %v800
    %v926 = vsub.f32 0.0, %v801
    %v927 = vsub.f32 0.0, %v802
    %v928 = vsub.f32 0.0, %v803
    %v929 = vsub.f32 0.0, %v804
    %v930 = vsub.f32 0.0, %v805
    %v931 = vsub.f32 0.0, %v806
    %v932 = vsub.f32 0.0, %v807
    %v933 = vsub.f32 0.0, %v808
    %v934 = vsub.f32 0.0, %v809
    %v935 = vsub.f32 0.0, %v810
    %v936 = vsub.f32 0.0, %v811
    %v937 = vsub.f32 0.0, %v812
    %v938 = vsub.f32 0.0, %v813
    %v939 = vsub.f32 0.0, %v814
    %v940 = vsub.f32 0.0, %v815
    %v941 = vsub.f32 0.0, %v816
    %v942 = vsub.f32 0.0, %v817
    %v943 = vsub.f32 0.0, %v818
    %v944 = vsub.f32 0.0, %v819
    %v945 = vsub.f32 0.0, %v820
    %v946 = vsub.f32 0.0, %v821
    %v947 = vsub.f32 0.0, %v822
    %v948 = vsub.f32 0.0, %v823
    %v949 = vsub.f32 0.0, %v824
    %v950 = vsub.f32 0.0, %v825
    %v951 = vsub.f32 0.0, %v826
    %v952 = vsub.f32 0.0, %v827
    %v953 = vsub.f32 0.0, %v828
    %v954 = vsub.f32 0.0, %v829
    %v955 = vsub.f32 0.0, %v830
    %v956 = vsub.f32 0.0, %v831
    %v957 = vsub.f32 0.0, %v832
    %v958 = vsub.f32 0.0, %v833
    %v959 = vsub.f32 0.0, %v834
    %v960 = vsub.f32 0.0, %v835
    %v961 = vsub.f32 0.0, %v836
    %v962 = vsub.f32 0.0, %v837
    %v963 = vsub.f32 0.0, %v838
    %v964 = vsub.f32 0.0, %v839
    %v965 = vsub.f32 0.0, %v840
    %v966 = vsub.f32 0.0, %v841
    %v967 = vsub.f32 0.0, %v842
    %v968 = vsub.f32 0.0, %v843
    %v969 = vsub.f32 0.0, %v844
    %v970 = vsub.f32 0.0, %v845
    %v971 = vsub.f32 0.0, %v846
    %v972 = vsub.f32 0.0, %v847
    %v973 = vsub.f32 0.0, %v848
    %v974 = vsub.f32 0.0, %v849
    %v975 = vsub.f32 0.0, %v850
    %v976 = vsub.f32 0.0, %v851
    %v977 = vsub.f32 0.0, %v852
    %v978 = vsub.f32 0.0, %v853
    %v979 = vsub.f32 0.0, %v854
    %v980 = vsub.f32 0.0, %v855
    %v981 = vsub.f32 0.0, %v856
    %v982 = vsub.f32 0.0, %v857
    %v983 = vsub.f32 0.0, %v858
    %v984 = vsub.f32 0.0, %v859
    %v985 = vsub.f32 0.0, %v860
    %v986 = vsub.f32 0.0, %v861
    %v987 = vsub.f32 0.0, %v862
    %v988 = vsub.f32 0.0, %v863
    %v989 = vsub.f32 0.0, %v864
    %v990 = vsub.f32 0.0, %v865
    %v991 = vsub.f32 0.0, %v866
    %v992 = vsub.f32 0.0, %v867
    %v993 = vsub.f32 0.0, %v868
    %v994 = vsub.f32 0.0, %v869
    %v995 = vsub.f32 0.0, %v870
    %v996 = vsub.f32 0.0, %v871
    %v997 = vsub.f32 0.0, %v872
    %v998 = vsub.f32 0.0, %v873
    %v999 = vsub.f32 0.0, %v874
    %v1000 = vsub.f32 0.0, %v875
    %v1001 = vsub.f32 0.0, %v876
    %v1002 = vsub.f32 0.0, %v877
    %v1003 = vsub.f32 0.0, %v878
    %v1004 = vsub.f32 0.0, %v879
    %v1005 = vsub.f32 0.0, %v880
    %v1006 = vsub.f32 0.0, %v881
    %v1007 = vsub.f32 0.0, %v882
    %v1008 = vsub.f32 0.0, %v883
    %v1009 = vsub.f32 0.0, %v884
    %v1010 = vsub.f32 0.0, %v885
    %v1011 = vsub.f32 0.0, %v886
    %v1012 = vsub.f32 0.0, %v887
    %v1013 = vsub.f32 0.0, %v888
    %v1014 = vsub.f32 0.0, %v889
    %v1015 = vsub.f32 0.0, %v890
    %v1016 = vsub.f32 0.0, %v891
    %v1017 = vsub.f32 0.0, %v892
    %v1018 = vsub.f32 0.0, %v893
    %v1019 = vsub.f32 0.0, %v894
    %v1020 = vsub.f32 0.0, %v895
    %v1021 = vsub.f32 0.0, %v896
    %v1022 = vsub.f32 0.0, %v897
    %v1023 = vsub.f32 0.0, %v898
    %v1024 = vsub.f32 0.0, %v899
    %v1025 = vsub.f32 0.0, %v900
    %v1026 = vsub.f32 0.0, %v901
    %vm1027 = vcmask 7168
    %1028 = vst.msk [vmem:[%s3] sm:$0xff] %vm1027, %v902
    %1029 = vst.msk [vmem:[%s3 + $0x8] sm:$0xff] %vm1027, %v903
    %1030 = vst.msk [vmem:[%s3 + $0x10] sm:$0xff] %vm1027, %v904
    %1031 = vst.msk [vmem:[%s3 + $0x18] sm:$0xff] %vm1027, %v905
    %1032 = vst.msk [vmem:[%s3 + $0x20] sm:$0xff] %vm1027, %v906
    %1033 = vst.msk [vmem:[%s3 + $0x28] sm:$0xff] %vm1027, %v907
    %1034 = vst.msk [vmem:[%s3 + $0x30] sm:$0xff] %vm1027, %v908
    %1035 = vst.msk [vmem:[%s3 + $0x38] sm:$0xff] %vm1027, %v909
    %1036 = vst.msk [vmem:[%s3 + $0x40] sm:$0xff] %vm1027, %v910
    %1037 = vst.msk [vmem:[%s3 + $0x48] sm:$0xff] %vm1027, %v911
    %1038 = vst.msk [vmem:[%s3 + $0x50] sm:$0xff] %vm1027, %v912
    %1039 = vst.msk [vmem:[%s3 + $0x58] sm:$0xff] %vm1027, %v913
    %1040 = vst.msk [vmem:[%s3 + $0x60] sm:$0xff] %vm1027, %v914
    %1041 = vst.msk [vmem:[%s3 + $0x68] sm:$0xff] %vm1027, %v915
    %1042 = vst.msk [vmem:[%s3 + $0x70] sm:$0xff] %vm1027, %v916
    %1043 = vst.msk [vmem:[%s3 + $0x78] sm:$0xff] %vm1027, %v917
    %1044 = vst.msk [vmem:[%s3 + $0x80] sm:$0xff] %vm1027, %v918
    %1045 = vst.msk [vmem:[%s3 + $0x88] sm:$0xff] %vm1027, %v919
    %1046 = vst.msk [vmem:[%s3 + $0x90] sm:$0xff] %vm1027, %v920
    %1047 = vst.msk [vmem:[%s3 + $0x98] sm:$0xff] %vm1027, %v921
    %1048 = vst.msk [vmem:[%s3 + $0xa0] sm:$0xff] %vm1027, %v922
    %1049 = vst.msk [vmem:[%s3 + $0xa8] sm:$0xff] %vm1027, %v923
    %1050 = vst.msk [vmem:[%s3 + $0xb0] sm:$0xff] %vm1027, %v924
    %1051 = vst.msk [vmem:[%s3 + $0xb8] sm:$0xff] %vm1027, %v925
    %1052 = vst.msk [vmem:[%s3 + $0xc0] sm:$0xff] %vm1027, %v926
    %1053 = vst.msk [vmem:[%s3 + $0xc8] sm:$0xff] %vm1027, %v927
    %1054 = vst.msk [vmem:[%s3 + $0xd0] sm:$0xff] %vm1027, %v928
    %1055 = vst.msk [vmem:[%s3 + $0xd8] sm:$0xff] %vm1027, %v929
    %1056 = vst.msk [vmem:[%s3 + $0xe0] sm:$0xff] %vm1027, %v930
    %1057 = vst.msk [vmem:[%s3 + $0xe8] sm:$0xff] %vm1027, %v931
    %1058 = vst.msk [vmem:[%s3 + $0xf0] sm:$0xff] %vm1027, %v932
    %1059 = vst.msk [vmem:[%s3 + $0xf8] sm:$0xff] %vm1027, %v933
    %1060 = vst.msk [vmem:[%s3 + $0x100] sm:$0xff] %vm1027, %v934
    %1061 = vst.msk [vmem:[%s3 + $0x108] sm:$0xff] %vm1027, %v935
    %1062 = vst.msk [vmem:[%s3 + $0x110] sm:$0xff] %vm1027, %v936
    %1063 = vst.msk [vmem:[%s3 + $0x118] sm:$0xff] %vm1027, %v937
    %1064 = vst.msk [vmem:[%s3 + $0x120] sm:$0xff] %vm1027, %v938
    %1065 = vst.msk [vmem:[%s3 + $0x128] sm:$0xff] %vm1027, %v939
    %1066 = vst.msk [vmem:[%s3 + $0x130] sm:$0xff] %vm1027, %v940
    %1067 = vst.msk [vmem:[%s3 + $0x138] sm:$0xff] %vm1027, %v941
    %1068 = vst.msk [vmem:[%s3 + $0x140] sm:$0xff] %vm1027, %v942
    %1069 = vst.msk [vmem:[%s3 + $0x148] sm:$0xff] %vm1027, %v943
    %1070 = vst.msk [vmem:[%s3 + $0x150] sm:$0xff] %vm1027, %v944
    %1071 = vst.msk [vmem:[%s3 + $0x158] sm:$0xff] %vm1027, %v945
    %1072 = vst.msk [vmem:[%s3 + $0x160] sm:$0xff] %vm1027, %v946
    %1073 = vst.msk [vmem:[%s3 + $0x168] sm:$0xff] %vm1027, %v947
    %1074 = vst.msk [vmem:[%s3 + $0x170] sm:$0xff] %vm1027, %v948
    %1075 = vst.msk [vmem:[%s3 + $0x178] sm:$0xff] %vm1027, %v949
    %1076 = vst.msk [vmem:[%s3 + $0x180] sm:$0xff] %vm1027, %v950
    %1077 = vst.msk [vmem:[%s3 + $0x188] sm:$0xff] %vm1027, %v951
    %1078 = vst.msk [vmem:[%s3 + $0x190] sm:$0xff] %vm1027, %v952
    %1079 = vst.msk [vmem:[%s3 + $0x198] sm:$0xff] %vm1027, %v953
    %1080 = vst.msk [vmem:[%s3 + $0x1a0] sm:$0xff] %vm1027, %v954
    %1081 = vst.msk [vmem:[%s3 + $0x1a8] sm:$0xff] %vm1027, %v955
    %1082 = vst.msk [vmem:[%s3 + $0x1b0] sm:$0xff] %vm1027, %v956
    %1083 = vst.msk [vmem:[%s3 + $0x1b8] sm:$0xff] %vm1027, %v957
    %1084 = vst.msk [vmem:[%s3 + $0x1c0] sm:$0xff] %vm1027, %v958
    %1085 = vst.msk [vmem:[%s3 + $0x1c8] sm:$0xff] %vm1027, %v959
    %1086 = vst.msk [vmem:[%s3 + $0x1d0] sm:$0xff] %vm1027, %v960
    %1087 = vst.msk [vmem:[%s3 + $0x1d8] sm:$0xff] %vm1027, %v961
    %1088 = vst.msk [vmem:[%s3 + $0x1e0] sm:$0xff] %vm1027, %v962
    %1089 = vst.msk [vmem:[%s3 + $0x1e8] sm:$0xff] %vm1027, %v963
    %1090 = vst.msk [vmem:[%s3 + $0x1f0] sm:$0xff] %vm1027, %v964
    %1091 = vst.msk [vmem:[%s3 + $0x1f8] sm:$0xff] %vm1027, %v965
    %1092 = vst.msk [vmem:[%s3 + $0x200] sm:$0xff] %vm1027, %v966
    %1093 = vst.msk [vmem:[%s3 + $0x208] sm:$0xff] %vm1027, %v967
    %1094 = vst.msk [vmem:[%s3 + $0x210] sm:$0xff] %vm1027, %v968
    %1095 = vst.msk [vmem:[%s3 + $0x218] sm:$0xff] %vm1027, %v969
    %1096 = vst.msk [vmem:[%s3 + $0x220] sm:$0xff] %vm1027, %v970
    %1097 = vst.msk [vmem:[%s3 + $0x228] sm:$0xff] %vm1027, %v971
    %1098 = vst.msk [vmem:[%s3 + $0x230] sm:$0xff] %vm1027, %v972
    %1099 = vst.msk [vmem:[%s3 + $0x238] sm:$0xff] %vm1027, %v973
    %1100 = vst.msk [vmem:[%s3 + $0x240] sm:$0xff] %vm1027, %v974
    %1101 = vst.msk [vmem:[%s3 + $0x248] sm:$0xff] %vm1027, %v975
    %1102 = vst.msk [vmem:[%s3 + $0x250] sm:$0xff] %vm1027, %v976
    %1103 = vst.msk [vmem:[%s3 + $0x258] sm:$0xff] %vm1027, %v977
    %1104 = vst.msk [vmem:[%s3 + $0x260] sm:$0xff] %vm1027, %v978
    %1105 = vst.msk [vmem:[%s3 + $0x268] sm:$0xff] %vm1027, %v979
    %1106 = vst.msk [vmem:[%s3 + $0x270] sm:$0xff] %vm1027, %v980
    %1107 = vst.msk [vmem:[%s3 + $0x278] sm:$0xff] %vm1027, %v981
    %1108 = vst.msk [vmem:[%s3 + $0x280] sm:$0xff] %vm1027, %v982
    %1109 = vst.msk [vmem:[%s3 + $0x288] sm:$0xff] %vm1027, %v983
    %1110 = vst.msk [vmem:[%s3 + $0x290] sm:$0xff] %vm1027, %v984
    %1111 = vst.msk [vmem:[%s3 + $0x298] sm:$0xff] %vm1027, %v985
    %1112 = vst.msk [vmem:[%s3 + $0x2a0] sm:$0xff] %vm1027, %v986
    %1113 = vst.msk [vmem:[%s3 + $0x2a8] sm:$0xff] %vm1027, %v987
    %1114 = vst.msk [vmem:[%s3 + $0x2b0] sm:$0xff] %vm1027, %v988
    %1115 = vst.msk [vmem:[%s3 + $0x2b8] sm:$0xff] %vm1027, %v989
    %1116 = vst.msk [vmem:[%s3 + $0x2c0] sm:$0xff] %vm1027, %v990
    %1117 = vst.msk [vmem:[%s3 + $0x2c8] sm:$0xff] %vm1027, %v991
    %1118 = vst.msk [vmem:[%s3 + $0x2d0] sm:$0xff] %vm1027, %v992
    %1119 = vst.msk [vmem:[%s3 + $0x2d8] sm:$0xff] %vm1027, %v993
    %1120 = vst.msk [vmem:[%s3 + $0x2e0] sm:$0xff] %vm1027, %v994
    %1121 = vst.msk [vmem:[%s3 + $0x2e8] sm:$0xff] %vm1027, %v995
    %1122 = vst.msk [vmem:[%s3 + $0x2f0] sm:$0xff] %vm1027, %v996
    %1123 = vst.msk [vmem:[%s3 + $0x2f8] sm:$0xff] %vm1027, %v997
    %1124 = vst.msk [vmem:[%s3 + $0x300] sm:$0xff] %vm1027, %v998
    %1125 = vst.msk [vmem:[%s3 + $0x308] sm:$0xff] %vm1027, %v999
    %1126 = vst.msk [vmem:[%s3 + $0x310] sm:$0xff] %vm1027, %v1000
    %1127 = vst.msk [vmem:[%s3 + $0x318] sm:$0xff] %vm1027, %v1001
    %1128 = vst.msk [vmem:[%s3 + $0x320] sm:$0xff] %vm1027, %v1002
    %1129 = vst.msk [vmem:[%s3 + $0x328] sm:$0xff] %vm1027, %v1003
    %1130 = vst.msk [vmem:[%s3 + $0x330] sm:$0xff] %vm1027, %v1004
    %1131 = vst.msk [vmem:[%s3 + $0x338] sm:$0xff] %vm1027, %v1005
    %1132 = vst.msk [vmem:[%s3 + $0x340] sm:$0xff] %vm1027, %v1006
    %1133 = vst.msk [vmem:[%s3 + $0x348] sm:$0xff] %vm1027, %v1007
    %1134 = vst.msk [vmem:[%s3 + $0x350] sm:$0xff] %vm1027, %v1008
    %1135 = vst.msk [vmem:[%s3 + $0x358] sm:$0xff] %vm1027, %v1009
    %1136 = vst.msk [vmem:[%s3 + $0x360] sm:$0xff] %vm1027, %v1010
    %1137 = vst.msk [vmem:[%s3 + $0x368] sm:$0xff] %vm1027, %v1011
    %1138 = vst.msk [vmem:[%s3 + $0x370] sm:$0xff] %vm1027, %v1012
    %1139 = vst.msk [vmem:[%s3 + $0x378] sm:$0xff] %vm1027, %v1013
    %1140 = vst.msk [vmem:[%s3 + $0x380] sm:$0xff] %vm1027, %v1014
    %1141 = vst.msk [vmem:[%s3 + $0x388] sm:$0xff] %vm1027, %v1015
    %1142 = vst.msk [vmem:[%s3 + $0x390] sm:$0xff] %vm1027, %v1016
    %1143 = vst.msk [vmem:[%s3 + $0x398] sm:$0xff] %vm1027, %v1017
    %1144 = vst.msk [vmem:[%s3 + $0x3a0] sm:$0xff] %vm1027, %v1018
    %1145 = vst.msk [vmem:[%s3 + $0x3a8] sm:$0xff] %vm1027, %v1019
    %1146 = vst.msk [vmem:[%s3 + $0x3b0] sm:$0xff] %vm1027, %v1020
    %1147 = vst.msk [vmem:[%s3 + $0x3b8] sm:$0xff] %vm1027, %v1021
    %1148 = vst.msk [vmem:[%s3 + $0x3c0] sm:$0xff] %vm1027, %v1022
    %1149 = vst.msk [vmem:[%s3 + $0x3c8] sm:$0xff] %vm1027, %v1023
    %1150 = vst.msk [vmem:[%s3 + $0x3d0] sm:$0xff] %vm1027, %v1024
    %1151 = vst.msk [vmem:[%s3 + $0x3d8] sm:$0xff] %vm1027, %v1025
    %1152 = vst.msk [vmem:[%s3 + $0x3e0] sm:$0xff] %vm1027, %v1026
    // Predicated region
    $region22: #{tpu_custom_call.1} parent=1 // pred_check
      _
    $region23: #{tpu_custom_call.1} parent=1 // pred_check_branch
      %1154 = sbr.rel (0) target = $region25
    $region24: #{tpu_custom_call.1} parent=1 // pred_region
      _
    $region25: #{tpu_custom_call.1} parent=1 // pred_fallthru
      _
    // Predicated region
    $region26: #{tpu_custom_call.1} parent=1 // pred_check
      _
    $region27: #{tpu_custom_call.1} parent=1 // pred_check_branch
      %1156 = sbr.rel (0) target = $region29
    $region28: #{tpu_custom_call.1} parent=1 // pred_region
      %s1158 = ssub.s32 16, 16
      %1159 = vsyncadd [#allocation4], %s1158
      %s1161 = sshll.u32 [#allocation7], 4
      %s1162 = int_to_ptr.vmem [resolvable:$true] %s1161
      %1164 = dma.vmem_to_hbm [thread:$0]  %s1162, 16, %s4, [#allocation4]
    $region29: #{tpu_custom_call.1} parent=1 // pred_fallthru
      _
    // Predicated region
    $region30: #{tpu_custom_call.1} parent=1 // pred_check
      _
    $region31: #{tpu_custom_call.1} parent=1 // pred_check_branch
      %1166 = sbr.rel (0) target = $region33
    $region32: #{tpu_custom_call.1} parent=1 // pred_region
      _
    $region33: #{tpu_custom_call.1} parent=1 // pred_fallthru
      _
    // Predicated region
    $region34: #{tpu_custom_call.1} parent=1 // pred_check
      _
    $region35: #{tpu_custom_call.1} parent=1 // pred_check_branch
      %1168 = sbr.rel (0) target = $region37
    $region36: #{tpu_custom_call.1} parent=1 // pred_region
      %1169 = dma.done [#allocation4], 16
    $region37: #{tpu_custom_call.1} parent=1 // pred_fallthru
      _
    %1170 = vsyncpa [#allocation3], 1
    %1171 = vsyncpa [#allocation6], 1
    %1172 = vsyncpa [#allocation4], 1

</llo_original>
